<compile_context>
chip_gen: v7x
topology: tpu7x:2x2x1
jax: 0.10.0
libtpu: 0.0.40
codegen_flags: <defaults>
</compile_context>

<pallas_src>
import functools
import math

import jax
import jax.numpy as jnp
from jax.experimental import pallas as pl
from jax.experimental.pallas import tpu as pltpu

HIDDEN = 32
NUM_HEADS = 4
HEAD_DIM = HIDDEN // NUM_HEADS
SEQ = 8
BATCH = 2
LN_EPS = 1e-5
IS_DECODER = True
NEG = -1e30   # large finite negative: exp() underflows to 0, never produces NaN


def _mha_kernel(x_ref, wqkv_ref, wo_ref, c32_ref, c64_ref, out_ref, *,
                batch, seq, num_heads):
    """Fused MHA block, one invocation for the whole batch.

    x_ref   : (B*S, H)      f32 activations, all batches flattened along rows
    wqkv_ref: (H, 3H)       bf16 [Wq/sqrt(d) | Wk | Wv]   (in, out layout)
    wo_ref  : (H, H)        bf16 output-projection weight
    c32_ref : (8+NB, H)     f32: rows 0..5 = bq/sqrt(d), bk, bv, bo, gamma, beta
                                 (rows 6..7 pad), rows 8.. = block-diag 0/1 selector
    c64_ref : (BS+NB, NB)   f32: rows 0..BS = additive causal/same-batch mask,
                                 rows BS..  = per-head-block 0/1 indicator
    out_ref : (B*S, H)
    """
    H = x_ref.shape[1]
    BS = batch * seq               # rows (all batches)
    NB = num_heads * BS            # block-diagonal columns

    x = x_ref[...].astype(jnp.float32)                                   # (BS, H)
    x_bf = x.astype(jnp.bfloat16)

    # ---- fused QKV projection: one bf16 MXU push over the whole batch ----
    qkv = jnp.dot(x_bf, wqkv_ref[...], preferred_element_type=jnp.float32)  # (BS, 3H)
    q = qkv[:, 0 * H:1 * H] + c32_ref[0:1, :]     # scale already folded into Wq/bq
    k = qkv[:, 1 * H:2 * H] + c32_ref[1:2, :]
    v = qkv[:, 2 * H:3 * H] + c32_ref[2:3, :]

    # ---- block-diagonal K / V via the precomputed 0/1 selector (no in-kernel iotas)
    blk = c32_ref[8:8 + NB, :]                                            # (NB, H)
    k_blk = jnp.concatenate([k] * num_heads, axis=0) * blk                # (NB, H)
    v_blk = jnp.concatenate([v] * num_heads, axis=0) * blk                # (NB, H)

    # scores[b*S+i, h*BS + b'*S + j] = q_h(b,i) . k_h(b',j) / sqrt(d)
    scores = jax.lax.dot_general(
        q.astype(jnp.bfloat16), k_blk.astype(jnp.bfloat16),
        dimension_numbers=(((1,), (1,)), ((), ())),
        preferred_element_type=jnp.float32)                               # (BS, NB)

    # combined same-batch (+ causal) mask: a single precomputed additive constant
    scores = scores + c64_ref[0:BS, :]

    # Softmax per head block.  Subtracting the per-row global max is exact
    # (shift-invariance within each block); per-block sums are broadcast back
    # with one small matmul against the precomputed block-indicator matrix.
    m = jnp.max(scores, axis=-1, keepdims=True)
    e = jnp.exp(scores - m)                                               # (BS, NB)
    blk_ind = c64_ref[BS:BS + NB, :]                                      # (NB, NB)
    denom = jnp.dot(e.astype(jnp.bfloat16), blk_ind.astype(jnp.bfloat16),
                    preferred_element_type=jnp.float32)                   # (BS, NB)
    p = e * pl.reciprocal(denom, approx=False)   # exact reciprocal (EUP is idle)

    # One matmul against block-diagonal V yields the already-concatenated heads.
    attn = jnp.dot(p.astype(jnp.bfloat16), v_blk.astype(jnp.bfloat16),
                   preferred_element_type=jnp.float32)                    # (BS, H)

    # ---- output projection + residual ----
    proj = jnp.dot(attn.astype(jnp.bfloat16), wo_ref[...],
                   preferred_element_type=jnp.float32) + c32_ref[3:4, :]
    # TODO(synk): nn.Dropout is identity in eval mode; no stochastic dropout applied.
    y = proj + x

    # ---- LayerNorm over the hidden dim (f32 VPU) ----
    mean = jnp.mean(y, axis=-1, keepdims=True)
    c = y - mean
    var = jnp.mean(c * c, axis=-1, keepdims=True)
    inv = jax.lax.rsqrt(var + LN_EPS)
    out_ref[...] = (c * inv * c32_ref[4:5, :] + c32_ref[5:6, :]).astype(out_ref.dtype)


def self_attention(x, w_qkv, wo, c32, c64, *, num_heads=NUM_HEADS):
    """x: (B, S, H); w_qkv: (H,3H) bf16; wo: (H,H) bf16; c32/c64: packed f32 constants."""
    B, S, H = x.shape
    x2 = x.reshape(B * S, H)          # contiguous flatten: free outside the kernel
    kernel = functools.partial(_mha_kernel, batch=B, seq=S, num_heads=num_heads)
    out2 = pl.pallas_call(
        kernel,
        out_shape=jax.ShapeDtypeStruct((B * S, H), x.dtype),
        # Single grid step: the whole problem (a few KB) is resident in VMEM.
        grid=(1,),
        in_specs=[
            pl.BlockSpec((B * S, H), lambda i: (0, 0)),        # activations
            pl.BlockSpec(w_qkv.shape, lambda i: (0, 0)),       # bf16 QKV weight slab
            pl.BlockSpec(wo.shape, lambda i: (0, 0)),          # bf16 out-proj weight
            pl.BlockSpec(c32.shape, lambda i: (0, 0)),         # biases/LN + blk selector
            pl.BlockSpec(c64.shape, lambda i: (0, 0)),         # mask + block indicator
        ],
        out_specs=pl.BlockSpec((B * S, H), lambda i: (0, 0)),
        compiler_params=pltpu.CompilerParams(
            dimension_semantics=("arbitrary",)),
    )(x2, w_qkv, wo, c32, c64)
    return out2.reshape(B, S, H)


def init_params(key, hidden):
    ks = jax.random.split(key, 8)
    bound = 1.0 / math.sqrt(hidden)   # PyTorch Linear default init range
    def lin(kw, kb):
        w = jax.random.uniform(kw, (hidden, hidden), jnp.float32, -bound, bound)
        b = jax.random.uniform(kb, (1, hidden), jnp.float32, -bound, bound)
        return w, b                    # (in, out) layout for x @ w
    wq, bq = lin(ks[0], ks[1])
    wk, bk = lin(ks[2], ks[3])
    wv, bv = lin(ks[4], ks[5])
    wo, bo = lin(ks[6], ks[7])
    gamma = jnp.ones((1, hidden), jnp.float32)
    beta = jnp.zeros((1, hidden), jnp.float32)
    return (wq, wk, wv, wo, bq, bk, bv, bo, gamma, beta)


def pack_params(params, batch, seq, num_heads=NUM_HEADS, is_decoder=IS_DECODER):
    """One-time host-side packing: fold 1/sqrt(head_dim) into Wq/bq, pre-cast the
    MXU weights to bf16, and precompute all mask / block-diag constants."""
    wq, wk, wv, wo, bq, bk, bv, bo, gamma, beta = params
    H = wq.shape[0]
    d = H // num_heads
    scale = 1.0 / math.sqrt(d)
    BS = batch * seq
    NB = num_heads * BS

    w_qkv = jnp.concatenate([wq * scale, wk, wv], axis=1).astype(jnp.bfloat16)  # (H, 3H)
    wo_bf = wo.astype(jnp.bfloat16)                                             # (H, H)

    # 32-lane-wide f32 slab: biases/LN rows (padded to 8) + block-diag selector.
    vecs = jnp.concatenate([bq * scale, bk, bv, bo, gamma, beta,
                            jnp.zeros((2, H), jnp.float32)], axis=0)            # (8, H)
    head_of_row = jnp.arange(NB) // BS            # block row  -> head
    head_of_col = jnp.arange(H) // d              # hidden col -> head
    blk = (head_of_row[:, None] == head_of_col[None, :]).astype(jnp.float32)    # (NB, H)
    c32 = jnp.concatenate([vecs, blk], axis=0)                                  # (8+NB, H)

    # 64-lane-wide f32 slab: additive causal/same-batch mask + block indicator.
    rows = jnp.arange(BS)
    row_b, row_i = rows // seq, rows % seq
    cidx = jnp.arange(NB)
    col_b, col_j = (cidx % BS) // seq, (cidx % BS) % seq
    allowed = col_b[None, :] == row_b[:, None]
    if is_decoder:
        allowed = allowed & (col_j[None, :] <= row_i[:, None])
    mask_add = jnp.where(allowed, 0.0, NEG).astype(jnp.float32)                 # (BS, NB)
    blk_ind = ((cidx[:, None] // BS) == (cidx[None, :] // BS)).astype(jnp.float32)  # (NB, NB)
    c64 = jnp.concatenate([mask_add, blk_ind], axis=0)                          # (BS+NB, NB)

    return w_qkv, wo_bf, c32, c64


def reference(x, params):
    """Pure-JAX f32 reference mirroring the PyTorch forward (dropout as identity)."""
    wq, wk, wv, wo, bq, bk, bv, bo, gamma, beta = params
    B, S, H = x.shape
    q = x @ wq + bq
    k = x @ wk + bk
    v = x @ wv + bv
    def split(t):
        return t.reshape(B, S, NUM_HEADS, HEAD_DIM).transpose(0, 2, 1, 3)
    q, k, v = split(q), split(k), split(v)
    scores = jnp.einsum("bhqd,bhkd->bhqk", q, k) / math.sqrt(HEAD_DIM)
    mask = jnp.tril(jnp.ones((S, S)))[None, None]
    scores = jnp.where(mask == 0, -jnp.inf, scores)
    p = jax.nn.softmax(scores, axis=-1)
    o = jnp.einsum("bhqk,bhkd->bhqd", p, v).transpose(0, 2, 1, 3).reshape(B, S, H)
    o = o @ wo + bo
    y = o + x
    mean = y.mean(-1, keepdims=True)
    var = ((y - mean) ** 2).mean(-1, keepdims=True)
    return (y - mean) / jnp.sqrt(var + LN_EPS) * gamma + beta


if __name__ == "__main__":
    key = jax.random.PRNGKey(0)
    kx, kp = jax.random.split(key)
    x = jax.random.normal(kx, (BATCH, SEQ, HIDDEN), jnp.float32)
    params = init_params(kp, HIDDEN)
    w_qkv, wo_bf, c32, c64 = pack_params(params, BATCH, SEQ)   # one-time packing

    out = self_attention(x, w_qkv, wo_bf, c32, c64)
    out = jax.block_until_ready(out)

    ref = reference(x, params)
    assert out.shape == (BATCH, SEQ, HIDDEN)
    err = float(jnp.max(jnp.abs(out - ref)))
    # Tolerance relaxed vs the all-f32 version: MXU operands are bf16 (per the
    # performance review); accumulation is f32, VPU/softmax/LN math is f32.
    assert jnp.allclose(out, ref, atol=3e-2, rtol=3e-2), f"max err {err}"
    print("KERNEL_OK")
</pallas_src>

<mosaic_0001>
module attributes {stable_mosaic.version = 11 : i64} {
  func.func @_mha_kernel(%arg0: i32, %arg1: memref<16x32xf32, #tpu.memory_space<vmem>>, %arg2: memref<32x96xbf16, #tpu.memory_space<vmem>>, %arg3: memref<32x32xbf16, #tpu.memory_space<vmem>>, %arg4: memref<72x32xf32, #tpu.memory_space<vmem>>, %arg5: memref<80x64xf32, #tpu.memory_space<vmem>>, %arg6: memref<16x32xf32, #tpu.memory_space<vmem>>) attributes {dimension_semantics = [#tpu.dimension_semantics<arbitrary>], iteration_bounds = array<i64: 1>, scalar_prefetch = 0 : i64, scratch_operands = 0 : i64, tpu.core_type = #tpu.core_type<tc>, window_params = [{pipeline_mode = #tpu.pipeline_mode<synchronous>, transform_indices = @transform_0, window_bounds = array<i64: 16, 32>}, {pipeline_mode = #tpu.pipeline_mode<synchronous>, transform_indices = @transform_1, window_bounds = array<i64: 32, 96>}, {pipeline_mode = #tpu.pipeline_mode<synchronous>, transform_indices = @transform_2, window_bounds = array<i64: 32, 32>}, {pipeline_mode = #tpu.pipeline_mode<synchronous>, transform_indices = @transform_3, window_bounds = array<i64: 72, 32>}, {pipeline_mode = #tpu.pipeline_mode<synchronous>, transform_indices = @transform_4, window_bounds = array<i64: 80, 64>}, {pipeline_mode = #tpu.pipeline_mode<synchronous>, transform_indices = @transform_5, window_bounds = array<i64: 16, 32>}]} {
    %c0 = arith.constant 0 : index
    %c0_0 = arith.constant 0 : index
    %0 = vector.load %arg1[%c0, %c0_0] : memref<16x32xf32, #tpu.memory_space<vmem>>, vector<16x32xf32>
    %1 = arith.truncf %0 : vector<16x32xf32> to vector<16x32xbf16>
    %c0_1 = arith.constant 0 : index
    %c0_2 = arith.constant 0 : index
    %2 = vector.load %arg2[%c0_1, %c0_2] : memref<32x96xbf16, #tpu.memory_space<vmem>>, vector<32x96xbf16>
    %cst = arith.constant dense<0.000000e+00> : vector<16x96xf32>
    %3 = tpu.matmul %1, %2, %cst {dimension_numbers = #tpu.dot_dimension_numbers<[1], [0], [0], [1], [0, 0, 1, 1], [], []>} : vector<16x32xbf16>, vector<32x96xbf16>, vector<16x96xf32> -> vector<16x96xf32>
    %4 = vector.extract_strided_slice %3 {offsets = [0, 0], sizes = [16, 32], strides = [1, 1]} : vector<16x96xf32> to vector<16x32xf32>
    %c0_3 = arith.constant 0 : index
    %c0_4 = arith.constant 0 : index
    %5 = vector.load %arg4[%c0_3, %c0_4] : memref<72x32xf32, #tpu.memory_space<vmem>>, vector<1x32xf32>
    %6 = vector.broadcast %5 : vector<1x32xf32> to vector<16x32xf32>
    %7 = arith.addf %4, %6 : vector<16x32xf32>
    %8 = vector.extract_strided_slice %3 {offsets = [0, 32], sizes = [16, 32], strides = [1, 1]} : vector<16x96xf32> to vector<16x32xf32>
    %c1 = arith.constant 1 : index
    %c0_5 = arith.constant 0 : index
    %9 = vector.load %arg4[%c1, %c0_5] : memref<72x32xf32, #tpu.memory_space<vmem>>, vector<1x32xf32>
    %10 = vector.broadcast %9 : vector<1x32xf32> to vector<16x32xf32>
    %11 = arith.addf %8, %10 : vector<16x32xf32>
    %12 = vector.extract_strided_slice %3 {offsets = [0, 64], sizes = [16, 32], strides = [1, 1]} : vector<16x96xf32> to vector<16x32xf32>
    %c2 = arith.constant 2 : index
    %c0_6 = arith.constant 0 : index
    %13 = vector.load %arg4[%c2, %c0_6] : memref<72x32xf32, #tpu.memory_space<vmem>>, vector<1x32xf32>
    %14 = vector.broadcast %13 : vector<1x32xf32> to vector<16x32xf32>
    %15 = arith.addf %12, %14 : vector<16x32xf32>
    %c8 = arith.constant 8 : index
    %c0_7 = arith.constant 0 : index
    %16 = vector.load %arg4[%c8, %c0_7] : memref<72x32xf32, #tpu.memory_space<vmem>>, vector<64x32xf32>
    %17 = tpu.concatenate %11, %11, %11, %11 in 0 : vector<16x32xf32>, vector<16x32xf32>, vector<16x32xf32>, vector<16x32xf32> -> vector<64x32xf32>
    %18 = arith.mulf %17, %16 : vector<64x32xf32>
    %19 = tpu.concatenate %15, %15, %15, %15 in 0 : vector<16x32xf32>, vector<16x32xf32>, vector<16x32xf32>, vector<16x32xf32> -> vector<64x32xf32>
    %20 = arith.mulf %19, %16 : vector<64x32xf32>
    %21 = arith.truncf %7 : vector<16x32xf32> to vector<16x32xbf16>
    %22 = arith.truncf %18 : vector<64x32xf32> to vector<64x32xbf16>
    %cst_8 = arith.constant dense<0.000000e+00> : vector<16x64xf32>
    %23 = tpu.matmul %21, %22, %cst_8 {dimension_numbers = #tpu.dot_dimension_numbers<[1], [1], [0], [0], [0, 0, 1, 0], [], []>} : vector<16x32xbf16>, vector<64x32xbf16>, vector<16x64xf32> -> vector<16x64xf32>
    %c0_9 = arith.constant 0 : index
    %c0_10 = arith.constant 0 : index
    %24 = vector.load %arg5[%c0_9, %c0_10] : memref<80x64xf32, #tpu.memory_space<vmem>>, vector<16x64xf32>
    %25 = arith.addf %23, %24 : vector<16x64xf32>
    %cst_11 = arith.constant dense<0xFF800000> : vector<16xf32>
    %26 = vector.multi_reduction <maximumf>, %25, %cst_11 [1] : vector<16x64xf32> to vector<16xf32>
    %27 = vector.shape_cast %26 : vector<16xf32> to vector<16x1xf32>
    %28 = vector.broadcast %27 : vector<16x1xf32> to vector<16x64xf32>
    %29 = arith.subf %25, %28 : vector<16x64xf32>
    %30 = math.exp %29 : vector<16x64xf32>
    %c16 = arith.constant 16 : index
    %c0_12 = arith.constant 0 : index
    %31 = vector.load %arg5[%c16, %c0_12] : memref<80x64xf32, #tpu.memory_space<vmem>>, vector<64x64xf32>
    %32 = arith.truncf %30 : vector<16x64xf32> to vector<16x64xbf16>
    %33 = arith.truncf %31 : vector<64x64xf32> to vector<64x64xbf16>
    %cst_13 = arith.constant dense<0.000000e+00> : vector<16x64xf32>
    %34 = tpu.matmul %32, %33, %cst_13 {dimension_numbers = #tpu.dot_dimension_numbers<[1], [0], [0], [1], [0, 0, 1, 1], [], []>} : vector<16x64xbf16>, vector<64x64xbf16>, vector<16x64xf32> -> vector<16x64xf32>
    %35 = tpu.reciprocal %34 : vector<16x64xf32> -> vector<16x64xf32>
    %36 = arith.mulf %30, %35 : vector<16x64xf32>
    %37 = arith.truncf %36 : vector<16x64xf32> to vector<16x64xbf16>
    %38 = arith.truncf %20 : vector<64x32xf32> to vector<64x32xbf16>
    %cst_14 = arith.constant dense<0.000000e+00> : vector<16x32xf32>
    %39 = tpu.matmul %37, %38, %cst_14 {dimension_numbers = #tpu.dot_dimension_numbers<[1], [0], [0], [1], [0, 0, 1, 1], [], []>} : vector<16x64xbf16>, vector<64x32xbf16>, vector<16x32xf32> -> vector<16x32xf32>
    %40 = arith.truncf %39 : vector<16x32xf32> to vector<16x32xbf16>
    %c0_15 = arith.constant 0 : index
    %c0_16 = arith.constant 0 : index
    %41 = vector.load %arg3[%c0_15, %c0_16] : memref<32x32xbf16, #tpu.memory_space<vmem>>, vector<32x32xbf16>
    %cst_17 = arith.constant dense<0.000000e+00> : vector<16x32xf32>
    %42 = tpu.matmul %40, %41, %cst_17 {dimension_numbers = #tpu.dot_dimension_numbers<[1], [0], [0], [1], [0, 0, 1, 1], [], []>} : vector<16x32xbf16>, vector<32x32xbf16>, vector<16x32xf32> -> vector<16x32xf32>
    %c3 = arith.constant 3 : index
    %c0_18 = arith.constant 0 : index
    %43 = vector.load %arg4[%c3, %c0_18] : memref<72x32xf32, #tpu.memory_space<vmem>>, vector<1x32xf32>
    %44 = vector.broadcast %43 : vector<1x32xf32> to vector<16x32xf32>
    %45 = arith.addf %42, %44 : vector<16x32xf32>
    %46 = arith.addf %45, %0 : vector<16x32xf32>
    %cst_19 = arith.constant dense<0.000000e+00> : vector<16xf32>
    %47 = vector.multi_reduction <add>, %46, %cst_19 [1] : vector<16x32xf32> to vector<16xf32>
    %48 = vector.shape_cast %47 : vector<16xf32> to vector<16x1xf32>
    %cst_20 = arith.constant 3.200000e+01 : f32
    %49 = vector.broadcast %cst_20 : f32 to vector<16x1xf32>
    %50 = arith.divf %48, %49 : vector<16x1xf32>
    %51 = vector.broadcast %50 : vector<16x1xf32> to vector<16x32xf32>
    %52 = arith.subf %46, %51 : vector<16x32xf32>
    %53 = arith.mulf %52, %52 : vector<16x32xf32>
    %cst_21 = arith.constant dense<0.000000e+00> : vector<16xf32>
    %54 = vector.multi_reduction <add>, %53, %cst_21 [1] : vector<16x32xf32> to vector<16xf32>
    %55 = vector.shape_cast %54 : vector<16xf32> to vector<16x1xf32>
    %cst_22 = arith.constant 3.200000e+01 : f32
    %56 = vector.broadcast %cst_22 : f32 to vector<16x1xf32>
    %57 = arith.divf %55, %56 : vector<16x1xf32>
    %cst_23 = arith.constant 9.99999974E-6 : f32
    %58 = vector.broadcast %cst_23 : f32 to vector<16x1xf32>
    %59 = arith.addf %57, %58 : vector<16x1xf32>
    %60 = math.rsqrt %59 : vector<16x1xf32>
    %61 = vector.broadcast %60 : vector<16x1xf32> to vector<16x32xf32>
    %62 = arith.mulf %52, %61 : vector<16x32xf32>
    %c4 = arith.constant 4 : index
    %c0_24 = arith.constant 0 : index
    %63 = vector.load %arg4[%c4, %c0_24] : memref<72x32xf32, #tpu.memory_space<vmem>>, vector<1x32xf32>
    %64 = vector.broadcast %63 : vector<1x32xf32> to vector<16x32xf32>
    %65 = arith.mulf %62, %64 : vector<16x32xf32>
    %c5 = arith.constant 5 : index
    %c0_25 = arith.constant 0 : index
    %66 = vector.load %arg4[%c5, %c0_25] : memref<72x32xf32, #tpu.memory_space<vmem>>, vector<1x32xf32>
    %67 = vector.broadcast %66 : vector<1x32xf32> to vector<16x32xf32>
    %68 = arith.addf %65, %67 : vector<16x32xf32>
    %c0_26 = arith.constant 0 : index
    %c0_27 = arith.constant 0 : index
    %69 = vector.load %arg6[%c0_26, %c0_27] : memref<16x32xf32, #tpu.memory_space<vmem>>, vector<16x32xf32>
    tpu.vector_store %arg6[%c0_26, %c0_27], %68 {strides = array<i32>} : memref<16x32xf32, #tpu.memory_space<vmem>>, vector<16x32xf32>,
    return
  }
  func.func @transform_0(%arg0: i32) -> (i32, i32) {
    %c0_i32 = arith.constant 0 : i32
    %c0_i32_0 = arith.constant 0 : i32
    %c0_i32_1 = arith.constant 0 : i32
    return %c0_i32, %c0_i32_0 : i32, i32
  }
  func.func @transform_1(%arg0: i32) -> (i32, i32) {
    %c0_i32 = arith.constant 0 : i32
    %c0_i32_0 = arith.constant 0 : i32
    %c0_i32_1 = arith.constant 0 : i32
    return %c0_i32, %c0_i32_0 : i32, i32
  }
  func.func @transform_2(%arg0: i32) -> (i32, i32) {
    %c0_i32 = arith.constant 0 : i32
    %c0_i32_0 = arith.constant 0 : i32
    %c0_i32_1 = arith.constant 0 : i32
    return %c0_i32, %c0_i32_0 : i32, i32
  }
  func.func @transform_3(%arg0: i32) -> (i32, i32) {
    %c0_i32 = arith.constant 0 : i32
    %c0_i32_0 = arith.constant 0 : i32
    %c0_i32_1 = arith.constant 0 : i32
    return %c0_i32, %c0_i32_0 : i32, i32
  }
  func.func @transform_4(%arg0: i32) -> (i32, i32) {
    %c0_i32 = arith.constant 0 : i32
    %c0_i32_0 = arith.constant 0 : i32
    %c0_i32_1 = arith.constant 0 : i32
    return %c0_i32, %c0_i32_0 : i32, i32
  }
  func.func @transform_5(%arg0: i32) -> (i32, i32) {
    %c0_i32 = arith.constant 0 : i32
    %c0_i32_0 = arith.constant 0 : i32
    %c0_i32_1 = arith.constant 0 : i32
    return %c0_i32, %c0_i32_0 : i32, i32
  }
}

</mosaic_0001>

<llo_original>
// kernel: tpu_custom_call.1
$region0: #{tpu_custom_call.1}
  #allocation0 [shape = 'u32[]', space=smem, size = 0x4, offset = 0x4, fixed_abs, tag = 'smem constant byte address 0x4 - core index']
  #allocation1 [shape = 'u32[144,128]{1,0:T(1,128)}', space=vmem, size = 0x12000, scoped, tag = 'internal scratch']
  %s0 = inlined_call_operand.vmem [shape: f32[16,32], index: 0, kind: input, shape index: {}]
  %s1 = inlined_call_operand.vmem [shape: bf16[32,96], index: 1, kind: input, shape index: {}]
  %s2 = inlined_call_operand.vmem [shape: bf16[32,32], index: 2, kind: input, shape index: {}]
  %s3 = inlined_call_operand.vmem [shape: f32[72,32], index: 3, kind: input, shape index: {}]
  %s4 = inlined_call_operand.vmem [shape: f32[80,64], index: 4, kind: input, shape index: {}]
  %s5 = inlined_call_operand.hbm [shape: f32[16,32], index: 5, kind: output, shape index: {}]
  %s6 = sld [smem:[#allocation0]]
  $region30: #{tpu_custom_call.1} parent=0
    _
  %s8 = ssub.s32 1, %s6
  %s9 = scalar_select 0, %s8, %s6
  $region1: #{tpu_custom_call.1} parent=0
    #allocation2 [shape = 'u8[8192]{0}', space=vmem, size = 0x2000, scoped, tag = 'output window, operand 0, single buffered']
    #allocation3 [shape = 's32[1]{0}', space=sflag, size = 0x4, scoped, tag = 'scoped memory for tpu_custom_call.1']
    %10 = vsyncpa [#allocation3], 0
    // Predicated region
    $region2: #{tpu_custom_call.1} parent=1 // pred_check
      _
    $region3: #{tpu_custom_call.1} parent=1 // pred_check_branch
      %12 = sbr.rel (0) target = $region5
    $region4: #{tpu_custom_call.1} parent=1 // pred_region
      _
    $region5: #{tpu_custom_call.1} parent=1 // pred_fallthru
      _
    // Predicated region
    $region6: #{tpu_custom_call.1} parent=1 // pred_check
      _
    $region7: #{tpu_custom_call.1} parent=1 // pred_check_branch
      %14 = sbr.rel (0) target = $region9
    $region8: #{tpu_custom_call.1} parent=1 // pred_region
      _
    $region9: #{tpu_custom_call.1} parent=1 // pred_fallthru
      _
    // Predicated region
    $region10: #{tpu_custom_call.1} parent=1 // pred_check
      _
    $region11: #{tpu_custom_call.1} parent=1 // pred_check_branch
      %16 = sbr.rel (0) target = $region13
    $region12: #{tpu_custom_call.1} parent=1 // pred_region
      _
    $region13: #{tpu_custom_call.1} parent=1 // pred_fallthru
      _
    // Predicated region
    $region14: #{tpu_custom_call.1} parent=1 // pred_check
      _
    $region15: #{tpu_custom_call.1} parent=1 // pred_check_branch
      %18 = sbr.rel (0) target = $region17
    $region16: #{tpu_custom_call.1} parent=1 // pred_region
      _
    $region17: #{tpu_custom_call.1} parent=1 // pred_fallthru
      _
    // Predicated region
    $region18: #{tpu_custom_call.1} parent=1 // pred_check
      _
    $region19: #{tpu_custom_call.1} parent=1 // pred_check_branch
      %20 = sbr.rel (0) target = $region21
    $region20: #{tpu_custom_call.1} parent=1 // pred_region
      _
    $region21: #{tpu_custom_call.1} parent=1 // pred_fallthru
      _
    %v22 = vld [vmem:[%s0] sm:$0xff]
    %v23 = vld [vmem:[%s0 + $0x8] sm:$0xff]
    %v24 = vpack.c.bf16 %v23, %v22
    %v25 = vld [vmem:[%s1] sm:$0xf]
    %v26 = vld [vmem:[%s1 + $0x4] sm:$0xf]
    %v27 = vld [vmem:[%s1 + $0x8] sm:$0xf]
    %v28 = vld [vmem:[%s1 + $0xc] sm:$0xf]
    %v33 = vunpack.c.l.b16 %v25
    %v34 = vunpack.c.l.b16 %v26
    %v35 = vunpack.c.l.b16 %v27
    %v36 = vunpack.c.l.b16 %v28
    %v37 = vpack.c.b16 %v34, %v33
    %v38 = vpack.c.b16 %v36, %v35
    %vm41 = vcmask 261120
    %v43 = vsel %vm41, %v24, 0
    %45 = vmatprep.subr.bf16.mxu0 0
    %46 = vmatpush1.bf16.msra.mxu0 %v37
    %47 = vmatprep.subr.bf16.mxu0 0
    %48 = vmatpush1.bf16.msra.mxu0 %v38
    %49 = vmatprep.subr.bf16.mxu0 0
    %50 = vmatpush1.bf16.msra.mxu0 0
    %51 = vmatprep.subr.bf16.mxu0 0
    %52 = vmatpush1.bf16.msra.mxu0 0
    %53 = vmatprep.subr.bf16.mxu0 0
    %54 = vmatpush1.bf16.msra.mxu0 0
    %55 = vmatprep.subr.bf16.mxu0 0
    %56 = vmatpush1.bf16.msra.mxu0 0
    %57 = vmatprep.subr.bf16.mxu0 0
    %58 = vmatpush1.bf16.msra.mxu0 0
    %59 = vmatprep.subr.bf16.mxu0 0
    %60 = vmatpush1.bf16.msra.mxu0 0
    %61 = vmatprep.subr.bf16.mxu0 0
    %62 = vmatpush1.bf16.msra.mxu0 0
    %63 = vmatprep.subr.bf16.mxu0 0
    %64 = vmatpush1.bf16.msra.mxu0 0
    %65 = vmatprep.subr.bf16.mxu0 0
    %66 = vmatpush1.bf16.msra.mxu0 0
    %67 = vmatprep.subr.bf16.mxu0 0
    %68 = vmatpush1.bf16.msra.mxu0 0
    %69 = vmatprep.subr.bf16.mxu0 0
    %70 = vmatpush1.bf16.msra.mxu0 0
    %71 = vmatprep.subr.bf16.mxu0 0
    %72 = vmatpush1.bf16.msra.mxu0 0
    %73 = vmatprep.subr.bf16.mxu0 0
    %74 = vmatpush1.bf16.msra.mxu0 0
    %75 = vmatprep.subr.bf16.mxu0 0
    %76 = vmatpush1.bf16.msra.mxu0 0
    %77 = vmatprep.mubr.bf16.mxu0 0
    %78 = vmatmul.mubr.bf16.gmra.mrb[0].mxu0 %v43
    %v79 = vpop.f32.mrb[0].mxu0
    %v80 = vadd.f32 0.0, %v79
    %v81 = vpop.f32.mrb[0].mxu0
    %v82 = vpop.f32.mrb[0].mxu0
    %v83 = vadd.f32 0.0, %v82
    %v84 = vpop.f32.mrb[0].mxu0
    %85 = vdwg.mxu0
    %v86 = vld [vmem:[%s3] sm:$0x1]
    %v87 = vlaneseq
    %v88 = vshrl.u32 %v87, 7
    %v89 = vsub.s32 0, %v88
    %v90 = vrot.slane %v86, %v89
    %v91 = vadd.f32 %v80, %v90
    %v92 = vadd.f32 %v83, %v90
    %v93 = vld [vmem:[%s3 + $0x1] sm:$0x1]
    %v94 = vlaneseq
    %v95 = vshrl.u32 %v94, 7
    %v96 = vsub.s32 0, %v95
    %v97 = vrot.slane %v93, %v96
    %99 = vrot.lane.b32.xlu0 %v97, 32
    %v100 = vpop.permute.xlu0 %99
    %v102 = vadd.f32 %v80, %v100
    %v103 = vadd.f32 %v83, %v100
    %v104 = vld [vmem:[%s3 + $0x2] sm:$0x1]
    %v105 = vlaneseq
    %v106 = vshrl.u32 %v105, 7
    %v107 = vsub.s32 0, %v106
    %v108 = vrot.slane %v104, %v107
    %110 = vrot.lane.b32.xlu0 %v108, 64
    %v111 = vpop.permute.xlu0 %110
    %v113 = vadd.f32 %v80, %v111
    %v114 = vadd.f32 %v83, %v111
    %v115 = vld [vmem:[%s3 + $0x8] sm:$0xff]
    %v116 = vld [vmem:[%s3 + $0x10] sm:$0xff]
    %v117 = vld [vmem:[%s3 + $0x18] sm:$0xff]
    %v118 = vld [vmem:[%s3 + $0x20] sm:$0xff]
    %v119 = vld [vmem:[%s3 + $0x28] sm:$0xff]
    %v120 = vld [vmem:[%s3 + $0x30] sm:$0xff]
    %v121 = vld [vmem:[%s3 + $0x38] sm:$0xff]
    %v122 = vld [vmem:[%s3 + $0x40] sm:$0xff]
    %131 = vrot.lane.b32.xlu0 %v115, 32
    %v132 = vpop.permute.xlu0 %131
    %133 = vrot.lane.b32.xlu0 %v116, 32
    %v134 = vpop.permute.xlu0 %133
    %135 = vrot.lane.b32.xlu0 %v117, 32
    %v136 = vpop.permute.xlu0 %135
    %137 = vrot.lane.b32.xlu0 %v118, 32
    %v138 = vpop.permute.xlu0 %137
    %139 = vrot.lane.b32.xlu0 %v119, 32
    %v140 = vpop.permute.xlu0 %139
    %141 = vrot.lane.b32.xlu0 %v120, 32
    %v142 = vpop.permute.xlu0 %141
    %143 = vrot.lane.b32.xlu0 %v121, 32
    %v144 = vpop.permute.xlu0 %143
    %145 = vrot.lane.b32.xlu0 %v122, 32
    %v146 = vpop.permute.xlu0 %145
    %v155 = vmul.f32 %v102, %v132
    %v156 = vmul.f32 %v103, %v134
    %v157 = vmul.f32 %v102, %v136
    %v158 = vmul.f32 %v103, %v138
    %v159 = vmul.f32 %v102, %v140
    %v160 = vmul.f32 %v103, %v142
    %v161 = vmul.f32 %v102, %v144
    %v162 = vmul.f32 %v103, %v146
    %163 = vrot.lane.b32.xlu0 %v115, 64
    %v164 = vpop.permute.xlu0 %163
    %165 = vrot.lane.b32.xlu0 %v116, 64
    %v166 = vpop.permute.xlu0 %165
    %167 = vrot.lane.b32.xlu0 %v117, 64
    %v168 = vpop.permute.xlu0 %167
    %169 = vrot.lane.b32.xlu0 %v118, 64
    %v170 = vpop.permute.xlu0 %169
    %171 = vrot.lane.b32.xlu0 %v119, 64
    %v172 = vpop.permute.xlu0 %171
    %173 = vrot.lane.b32.xlu0 %v120, 64
    %v174 = vpop.permute.xlu0 %173
    %175 = vrot.lane.b32.xlu0 %v121, 64
    %v176 = vpop.permute.xlu0 %175
    %177 = vrot.lane.b32.xlu0 %v122, 64
    %v178 = vpop.permute.xlu0 %177
    %v187 = vmul.f32 %v113, %v164
    %v188 = vmul.f32 %v114, %v166
    %v189 = vmul.f32 %v113, %v168
    %v190 = vmul.f32 %v114, %v170
    %v191 = vmul.f32 %v113, %v172
    %v192 = vmul.f32 %v114, %v174
    %v193 = vmul.f32 %v113, %v176
    %v194 = vmul.f32 %v114, %v178
    %v195 = vpack.c.bf16 %v92, %v91
    %v196 = vpack.c.bf16 %v156, %v155
    %v197 = vpack.c.bf16 %v158, %v157
    %v198 = vpack.c.bf16 %v160, %v159
    %v199 = vpack.c.bf16 %v162, %v161
    %v200 = vld [vmem:[%s4] sm:$0xff]
    %v201 = vld [vmem:[%s4 + $0x8] sm:$0xff]
    %206 = vrot.lane.b32.xlu0 %v196, 96
    %v207 = vpop.permute.xlu0 %206
    %208 = vrot.lane.b32.xlu0 %v197, 96
    %v209 = vpop.permute.xlu0 %208
    %210 = vrot.lane.b32.xlu0 %v198, 96
    %v211 = vpop.permute.xlu0 %210
    %212 = vrot.lane.b32.xlu0 %v199, 96
    %v213 = vpop.permute.xlu0 %212
    %v215 = vsel %vm41, %v195, 0
    %v218 = vsel %vm41, %v207, 0
    %v221 = vsel %vm41, %v209, 0
    %v224 = vsel %vm41, %v211, 0
    %v227 = vsel %vm41, %v213, 0
    %229 = vmatprep.subr.bf16.mxu0 0
    %230 = vmatpush1.bf16.xpose.msra.mxu0 %v218
    %231 = vmatprep.subr.bf16.mxu0 0
    %232 = vmatpush1.bf16.xpose.msra.mxu0 %v221
    %233 = vmatprep.subr.bf16.mxu0 0
    %234 = vmatpush1.bf16.xpose.msra.mxu0 %v224
    %235 = vmatprep.subr.bf16.mxu0 0
    %236 = vmatpush1.bf16.xpose.msra.mxu0 %v227
    %237 = vmatprep.subr.bf16.mxu0 0
    %238 = vmatpush1.bf16.xpose.msra.mxu0 0
    %239 = vmatprep.subr.bf16.mxu0 0
    %240 = vmatpush1.bf16.xpose.msra.mxu0 0
    %241 = vmatprep.subr.bf16.mxu0 0
    %242 = vmatpush1.bf16.xpose.msra.mxu0 0
    %243 = vmatprep.subr.bf16.mxu0 0
    %244 = vmatpush1.bf16.xpose.msra.mxu0 0
    %245 = vmatprep.subr.bf16.mxu0 0
    %246 = vmatpush1.bf16.xpose.msra.mxu0 0
    %247 = vmatprep.subr.bf16.mxu0 0
    %248 = vmatpush1.bf16.xpose.msra.mxu0 0
    %249 = vmatprep.subr.bf16.mxu0 0
    %250 = vmatpush1.bf16.xpose.msra.mxu0 0
    %251 = vmatprep.subr.bf16.mxu0 0
    %252 = vmatpush1.bf16.xpose.msra.mxu0 0
    %253 = vmatprep.subr.bf16.mxu0 0
    %254 = vmatpush1.bf16.xpose.msra.mxu0 0
    %255 = vmatprep.subr.bf16.mxu0 0
    %256 = vmatpush1.bf16.xpose.msra.mxu0 0
    %257 = vmatprep.subr.bf16.mxu0 0
    %258 = vmatpush1.bf16.xpose.msra.mxu0 0
    %259 = vmatprep.subr.bf16.mxu0 0
    %260 = vmatpush1.bf16.xpose.msra.mxu0 0
    %261 = vmatprep.mubr.bf16.mxu0 0
    %262 = vmatmul.mubr.bf16.gmra.mrb[0].mxu0 %v215
    %v263 = vpop.f32.mrb[0].mxu0
    %v264 = vadd.f32 %v200, %v263
    %v265 = vpop.f32.mrb[0].mxu0
    %v266 = vpop.f32.mrb[0].mxu0
    %v267 = vadd.f32 %v201, %v266
    %v268 = vpop.f32.mrb[0].mxu0
    %269 = vdwg.mxu0
    %vm270 = vcmask 523264
    %v271 = vsel %vm270, %v264, -inf
    %272 = vmax.xlane.f32.xlu0 %v271
    %v273 = vpop.xlane.xlu0 %272
    %v274 = vsel %vm270, %v267, -inf
    %275 = vmax.xlane.f32.xlu0 %v274
    %v276 = vpop.xlane.xlu0 %275
    %v277 = vsub.f32 %v264, %v273
    %v278 = vsub.f32 %v267, %v276
    %v279 = vmul.f32 %v277, 1.442695
    %v280 = vpow.pop %v279
    %v281 = vmul.f32 %v278, 1.442695
    %v282 = vpow.pop %v281
    %v283 = vld [vmem:[%s4 + $0x10] sm:$0xff]
    %v284 = vld [vmem:[%s4 + $0x18] sm:$0xff]
    %v285 = vld [vmem:[%s4 + $0x20] sm:$0xff]
    %v286 = vld [vmem:[%s4 + $0x28] sm:$0xff]
    %v287 = vld [vmem:[%s4 + $0x30] sm:$0xff]
    %v288 = vld [vmem:[%s4 + $0x38] sm:$0xff]
    %v289 = vld [vmem:[%s4 + $0x40] sm:$0xff]
    %v290 = vld [vmem:[%s4 + $0x48] sm:$0xff]
    %v291 = vpack.c.bf16 %v282, %v280
    %v292 = vpack.c.bf16 %v284, %v283
    %v293 = vpack.c.bf16 %v286, %v285
    %v294 = vpack.c.bf16 %v288, %v287
    %v295 = vpack.c.bf16 %v290, %v289
    %v297 = vsel %vm270, %v291, 0
    %299 = vmatprep.subr.bf16.mxu0 0
    %300 = vmatpush1.bf16.msra.mxu0 %v292
    %301 = vmatprep.subr.bf16.mxu0 0
    %302 = vmatpush1.bf16.msra.mxu0 %v293
    %303 = vmatprep.subr.bf16.mxu0 0
    %304 = vmatpush1.bf16.msra.mxu0 %v294
    %305 = vmatprep.subr.bf16.mxu0 0
    %306 = vmatpush1.bf16.msra.mxu0 %v295
    %307 = vmatprep.subr.bf16.mxu0 0
    %308 = vmatpush1.bf16.msra.mxu0 0
    %309 = vmatprep.subr.bf16.mxu0 0
    %310 = vmatpush1.bf16.msra.mxu0 0
    %311 = vmatprep.subr.bf16.mxu0 0
    %312 = vmatpush1.bf16.msra.mxu0 0
    %313 = vmatprep.subr.bf16.mxu0 0
    %314 = vmatpush1.bf16.msra.mxu0 0
    %315 = vmatprep.subr.bf16.mxu0 0
    %316 = vmatpush1.bf16.msra.mxu0 0
    %317 = vmatprep.subr.bf16.mxu0 0
    %318 = vmatpush1.bf16.msra.mxu0 0
    %319 = vmatprep.subr.bf16.mxu0 0
    %320 = vmatpush1.bf16.msra.mxu0 0
    %321 = vmatprep.subr.bf16.mxu0 0
    %322 = vmatpush1.bf16.msra.mxu0 0
    %323 = vmatprep.subr.bf16.mxu0 0
    %324 = vmatpush1.bf16.msra.mxu0 0
    %325 = vmatprep.subr.bf16.mxu0 0
    %326 = vmatpush1.bf16.msra.mxu0 0
    %327 = vmatprep.subr.bf16.mxu0 0
    %328 = vmatpush1.bf16.msra.mxu0 0
    %329 = vmatprep.subr.bf16.mxu0 0
    %330 = vmatpush1.bf16.msra.mxu0 0
    %331 = vmatprep.mubr.bf16.mxu0 0
    %332 = vmatmul.mubr.bf16.gmra.mrb[0].mxu0 %v297
    %v333 = vpop.f32.mrb[0].mxu0
    %v334 = vadd.f32 0.0, %v333
    %v335 = vpop.f32.mrb[0].mxu0
    %v336 = vpop.f32.mrb[0].mxu0
    %v337 = vadd.f32 0.0, %v336
    %v338 = vpop.f32.mrb[0].mxu0
    %339 = vdwg.mxu0
    %v340 = vrcp.pop %v334
    %v341 = vrcp.pop %v337
    %v342 = vmul.f32 %v280, %v340
    %v343 = vmul.f32 %v282, %v341
    %v344 = vpack.c.bf16 %v343, %v342
    %v345 = vpack.c.bf16 %v188, %v187
    %v346 = vpack.c.bf16 %v190, %v189
    %v347 = vpack.c.bf16 %v192, %v191
    %v348 = vpack.c.bf16 %v194, %v193
    %353 = vrot.lane.b32.xlu0 %v345, 64
    %v354 = vpop.permute.xlu0 %353
    %355 = vrot.lane.b32.xlu0 %v346, 64
    %v356 = vpop.permute.xlu0 %355
    %357 = vrot.lane.b32.xlu0 %v347, 64
    %v358 = vpop.permute.xlu0 %357
    %359 = vrot.lane.b32.xlu0 %v348, 64
    %v360 = vpop.permute.xlu0 %359
    %v366 = vsel %vm270, %v344, 0
    %368 = vmatprep.subr.bf16.mxu0 0
    %369 = vmatpush1.bf16.msra.mxu0 %v354
    %370 = vmatprep.subr.bf16.mxu0 0
    %371 = vmatpush1.bf16.msra.mxu0 %v356
    %372 = vmatprep.subr.bf16.mxu0 0
    %373 = vmatpush1.bf16.msra.mxu0 %v358
    %374 = vmatprep.subr.bf16.mxu0 0
    %375 = vmatpush1.bf16.msra.mxu0 %v360
    %376 = vmatprep.subr.bf16.mxu0 0
    %377 = vmatpush1.bf16.msra.mxu0 0
    %378 = vmatprep.subr.bf16.mxu0 0
    %379 = vmatpush1.bf16.msra.mxu0 0
    %380 = vmatprep.subr.bf16.mxu0 0
    %381 = vmatpush1.bf16.msra.mxu0 0
    %382 = vmatprep.subr.bf16.mxu0 0
    %383 = vmatpush1.bf16.msra.mxu0 0
    %384 = vmatprep.subr.bf16.mxu0 0
    %385 = vmatpush1.bf16.msra.mxu0 0
    %386 = vmatprep.subr.bf16.mxu0 0
    %387 = vmatpush1.bf16.msra.mxu0 0
    %388 = vmatprep.subr.bf16.mxu0 0
    %389 = vmatpush1.bf16.msra.mxu0 0
    %390 = vmatprep.subr.bf16.mxu0 0
    %391 = vmatpush1.bf16.msra.mxu0 0
    %392 = vmatprep.subr.bf16.mxu0 0
    %393 = vmatpush1.bf16.msra.mxu0 0
    %394 = vmatprep.subr.bf16.mxu0 0
    %395 = vmatpush1.bf16.msra.mxu0 0
    %396 = vmatprep.subr.bf16.mxu0 0
    %397 = vmatpush1.bf16.msra.mxu0 0
    %398 = vmatprep.subr.bf16.mxu0 0
    %399 = vmatpush1.bf16.msra.mxu0 0
    %400 = vmatprep.mubr.bf16.mxu0 0
    %401 = vmatmul.mubr.bf16.gmra.mrb[0].mxu0 %v366
    %v402 = vpop.f32.mrb[0].mxu0
    %v403 = vadd.f32 0.0, %v402
    %v404 = vpop.f32.mrb[0].mxu0
    %v405 = vpop.f32.mrb[0].mxu0
    %v406 = vadd.f32 0.0, %v405
    %v407 = vpop.f32.mrb[0].mxu0
    %408 = vdwg.mxu0
    %v409 = vpack.c.bf16 %v406, %v403
    %v410 = vld [vmem:[%s2] sm:$0xf]
    %v411 = vld [vmem:[%s2 + $0x4] sm:$0xf]
    %v412 = vld [vmem:[%s2 + $0x8] sm:$0xf]
    %v413 = vld [vmem:[%s2 + $0xc] sm:$0xf]
    %v414 = vld [vmem:[%s3 + $0x3] sm:$0x1]
    %v415 = vlaneseq
    %v416 = vshrl.u32 %v415, 7
    %v417 = vsub.s32 0, %v416
    %v418 = vrot.slane %v414, %v417
    %v423 = vunpack.c.l.b16 %v410
    %v424 = vunpack.c.l.b16 %v411
    %v425 = vunpack.c.l.b16 %v412
    %v426 = vunpack.c.l.b16 %v413
    %v427 = vpack.c.b16 %v424, %v423
    %v428 = vpack.c.b16 %v426, %v425
    %v432 = vsel %vm41, %v409, 0
    %434 = vmatprep.subr.bf16.mxu0 0
    %435 = vmatpush1.bf16.msra.mxu0 %v427
    %436 = vmatprep.subr.bf16.mxu0 0
    %437 = vmatpush1.bf16.msra.mxu0 %v428
    %438 = vmatprep.subr.bf16.mxu0 0
    %439 = vmatpush1.bf16.msra.mxu0 0
    %440 = vmatprep.subr.bf16.mxu0 0
    %441 = vmatpush1.bf16.msra.mxu0 0
    %442 = vmatprep.subr.bf16.mxu0 0
    %443 = vmatpush1.bf16.msra.mxu0 0
    %444 = vmatprep.subr.bf16.mxu0 0
    %445 = vmatpush1.bf16.msra.mxu0 0
    %446 = vmatprep.subr.bf16.mxu0 0
    %447 = vmatpush1.bf16.msra.mxu0 0
    %448 = vmatprep.subr.bf16.mxu0 0
    %449 = vmatpush1.bf16.msra.mxu0 0
    %450 = vmatprep.subr.bf16.mxu0 0
    %451 = vmatpush1.bf16.msra.mxu0 0
    %452 = vmatprep.subr.bf16.mxu0 0
    %453 = vmatpush1.bf16.msra.mxu0 0
    %454 = vmatprep.subr.bf16.mxu0 0
    %455 = vmatpush1.bf16.msra.mxu0 0
    %456 = vmatprep.subr.bf16.mxu0 0
    %457 = vmatpush1.bf16.msra.mxu0 0
    %458 = vmatprep.subr.bf16.mxu0 0
    %459 = vmatpush1.bf16.msra.mxu0 0
    %460 = vmatprep.subr.bf16.mxu0 0
    %461 = vmatpush1.bf16.msra.mxu0 0
    %462 = vmatprep.subr.bf16.mxu0 0
    %463 = vmatpush1.bf16.msra.mxu0 0
    %464 = vmatprep.subr.bf16.mxu0 0
    %465 = vmatpush1.bf16.msra.mxu0 0
    %466 = vmatprep.mubr.bf16.mxu0 0
    %467 = vmatmul.mubr.bf16.gmra.mrb[0].mxu0 %v432
    %v468 = vpop.f32.mrb[0].mxu0
    %v469 = vadd.f32 %v418, %v468
    %v470 = vpop.f32.mrb[0].mxu0
    %v471 = vpop.f32.mrb[0].mxu0
    %v472 = vadd.f32 %v418, %v471
    %v473 = vpop.f32.mrb[0].mxu0
    %474 = vdwg.mxu0
    %v475 = vadd.f32 %v469, %v22
    %v476 = vadd.f32 %v472, %v23
    %v477 = vsel %vm41, %v475, 0.0
    %478 = vadd.xlane.f32.xlu0 %v477
    %v479 = vpop.xlane.xlu0 %478
    %v480 = vsel %vm41, %v476, 0.0
    %481 = vadd.xlane.f32.xlu0 %v480
    %v482 = vpop.xlane.xlu0 %481
    %v483 = vrcp.pop 32.0
    %v484 = vmul.f32 %v479, %v483
    %v485 = vmul.f32 %v482, %v483
    %v486 = vsub.f32 %v475, %v484
    %v487 = vsub.f32 %v476, %v485
    %v488 = vmul.f32 %v486, %v486
    %v489 = vmul.f32 %v487, %v487
    %v490 = vsel %vm41, %v488, 0.0
    %491 = vadd.xlane.f32.xlu0 %v490
    %v492 = vpop.xlane.xlu0 %491
    %v493 = vsel %vm41, %v489, 0.0
    %494 = vadd.xlane.f32.xlu0 %v493
    %v495 = vpop.xlane.xlu0 %494
    %v496 = vmul.f32 %v492, %v483
    %v497 = vmul.f32 %v495, %v483
    %v498 = vadd.f32 %v496, 1e-05
    %v499 = vadd.f32 %v497, 1e-05
    %v500 = vrsqrt.pop %v498
    %v501 = vrsqrt.pop %v499
    %v502 = vmul.f32 %v486, %v500
    %v503 = vmul.f32 %v487, %v501
    %v504 = vld [vmem:[%s3 + $0x4] sm:$0x1]
    %v505 = vlaneseq
    %v506 = vshrl.u32 %v505, 7
    %v507 = vsub.s32 0, %v506
    %v508 = vrot.slane %v504, %v507
    %v509 = vmul.f32 %v502, %v508
    %v510 = vmul.f32 %v503, %v508
    %v511 = vld [vmem:[%s3 + $0x5] sm:$0x1]
    %v512 = vlaneseq
    %v513 = vshrl.u32 %v512, 7
    %v514 = vsub.s32 0, %v513
    %v515 = vrot.slane %v511, %v514
    %v516 = vadd.f32 %v509, %v515
    %v517 = vadd.f32 %v510, %v515
    %518 = vst.msk [vmem:[#allocation2] sm:$0xff] %vm41, %v516
    %519 = vst.msk [vmem:[#allocation2 + $0x8] sm:$0xff] %vm41, %v517
    // Predicated region
    $region22: #{tpu_custom_call.1} parent=1 // pred_check
      _
    $region23: #{tpu_custom_call.1} parent=1 // pred_check_branch
      %521 = sbr.rel (0) target = $region25
    $region24: #{tpu_custom_call.1} parent=1 // pred_region
      %s523 = ssub.s32 256, 256
      %524 = vsyncadd [#allocation3], %s523
      %s525 = sshll.u32 [#allocation2], 4
      %s526 = int_to_ptr.vmem [resolvable:$true] %s525
      %531 = dma.vmem_to_hbm [thread:$0]  %s526, 256, %s5, [#allocation3], 128, 128, 8
    $region25: #{tpu_custom_call.1} parent=1 // pred_fallthru
      _
    // Predicated region
    $region26: #{tpu_custom_call.1} parent=1 // pred_check
      _
    $region27: #{tpu_custom_call.1} parent=1 // pred_check_branch
      %533 = sbr.rel (0) target = $region29
    $region28: #{tpu_custom_call.1} parent=1 // pred_region
      %534 = dma.done [#allocation3], 256
    $region29: #{tpu_custom_call.1} parent=1 // pred_fallthru
      _
    %535 = vsyncpa [#allocation3], 1

</llo_original>
